<compile_context>
chip_gen: v5e
topology: v5e:2x2
jax: 0.10.0
libtpu: 0.0.40
codegen_flags: <defaults>
</compile_context>

<pallas_src>
import jax
import jax.numpy as jnp
from jax.experimental import pallas as pl
from jax.experimental.pallas import tpu as pltpu

KSIZE = 3
BN_EPS = 1e-5
LANE = 128


def _pick_nc_block(nc, h, w, h_out, w_out, vmem_budget=12 << 20):
    """Block size along the packed N*C (lane) axis + padded N*C extent."""
    per_image = 2 * (h * w + h_out * w_out) * 4      # double-buffered in+out, f32
    if nc <= LANE:
        return nc, nc                                # full-dim block (small problems)
    nc_pad = ((nc + LANE - 1) // LANE) * LANE        # lane-dense multiple of 128
    cap = max(LANE, (vmem_budget // per_image) // LANE * LANE)
    ncb = min(cap, nc_pad)
    # Best effort: >=2 grid steps so both v7x TensorCores get work.
    if ncb == nc_pad and nc_pad % (2 * LANE) == 0:
        ncb = nc_pad // 2
    while nc_pad % ncb:
        ncb -= LANE
    return ncb, nc_pad


def _make_kernel(stride):
    """3x3 conv (BN scale pre-folded into taps) + bias + ReLU, strided output.

    x_ref : VMEM (H, W, NCb)            images packed on the lane axis
    w_ref : SMEM (3, 3)                 taps with BN scale folded in
    b_ref : SMEM (1,)                   conv-bias + BN folded bias
    o_ref : VMEM (h_out, w_out, NCb)    strided, ReLU'd output
    """
    def kernel(x_ref, w_ref, b_ref, o_ref):
        h_out, w_out, _ = o_ref.shape
        # Hoist the 9 scalar tap reads out of the unrolled MAC loop.
        taps = [[w_ref[i, j] for j in range(KSIZE)] for i in range(KSIZE)]
        bias = b_ref[0]

        acc = jnp.zeros(o_ref.shape, jnp.float32)
        for di in range(KSIZE):
            for dj in range(KSIZE):
                if stride == 1:
                    xt = x_ref[pl.ds(di, h_out), pl.ds(dj, w_out), :]
                else:
                    # Strided reads subsample H (leading) and W (sublane)
                    # directly from VMEM; the lane axis (images) is untouched.
                    xt = x_ref[pl.ds(di, h_out, stride=stride),
                               pl.ds(dj, w_out, stride=stride), :]
                acc = acc + taps[di][dj] * xt
        o_ref[...] = jnp.maximum(acc + bias, 0.0).astype(o_ref.dtype)

    return kernel


def conv_dw_forward(x, w, conv_b, gamma, beta, run_mean, run_var, *, stride):
    """x: (N, C, H, W) float32.  Returns (N, C, H_out, W_out)."""
    n, c, h, wdim = x.shape
    h_out = (h - KSIZE) // stride + 1
    w_out = (wdim - KSIZE) // stride + 1
    nc = n * c

    # Fold inference BatchNorm into the conv: scale goes into the 3x3 weights
    # (conv is linear), conv-bias + BN shift collapse into one bias.
    scale = (gamma / jnp.sqrt(run_var + BN_EPS)).astype(jnp.float32)
    w_eff = (w.reshape(KSIZE, KSIZE) * scale).astype(jnp.float32)
    bias_eff = ((conv_b - run_mean) * scale + beta).astype(jnp.float32).reshape(1)

    ncb, nc_pad = _pick_nc_block(nc, h, wdim, h_out, w_out)

    # Lane-dense layout: (H, W, N*C).  Taps shift only leading/sublane axes.
    x_t = jnp.transpose(x.reshape(nc, h, wdim), (1, 2, 0)).astype(jnp.float32)
    if nc_pad != nc:
        x_t = jnp.pad(x_t, ((0, 0), (0, 0), (0, nc_pad - nc)))

    grid = (nc_pad // ncb,)
    y = pl.pallas_call(
        _make_kernel(stride),
        out_shape=jax.ShapeDtypeStruct((h_out, w_out, nc_pad), jnp.float32),
        grid=grid,
        in_specs=[
            pl.BlockSpec((h, wdim, ncb), lambda i: (0, 0, i)),
            pl.BlockSpec(memory_space=pltpu.MemorySpace.SMEM),
            pl.BlockSpec(memory_space=pltpu.MemorySpace.SMEM),
        ],
        out_specs=pl.BlockSpec((h_out, w_out, ncb), lambda i: (0, 0, i)),
        compiler_params=pltpu.CompilerParams(
            dimension_semantics=("parallel",)),
    )(x_t, w_eff, bias_eff)

    y = jnp.transpose(y[:, :, :nc], (2, 0, 1)).reshape(n, c, h_out, w_out)
    return y


def _reference(x, w, conv_b, gamma, beta, run_mean, run_var, *, stride):
    """Pure-JAX reference mirroring the PyTorch per-channel loop."""
    n, c, h, wdim = x.shape
    outs = []
    for i in range(c):
        xi = x[:, i:i + 1, :, :]
        yi = jax.lax.conv_general_dilated(
            xi, w, window_strides=(stride, stride), padding="VALID",
            dimension_numbers=("NCHW", "OIHW", "NCHW"))
        yi = yi + conv_b.reshape(1, 1, 1, 1)
        yi = (yi - run_mean) / jnp.sqrt(run_var + BN_EPS) * gamma + beta
        outs.append(jnp.maximum(yi, 0.0))
    return jnp.concatenate(outs, axis=1)


if __name__ == "__main__":
    key = jax.random.PRNGKey(0)
    kx, kw, kb = jax.random.split(key, 3)

    N, C, H, W = 2, 4, 16, 16

    x = jax.random.normal(kx, (N, C, H, W), dtype=jnp.float32)

    # Deterministic params (shapes per nn.Conv2d(1,1,3) + BatchNorm2d(1)).
    w = jax.random.normal(kw, (1, 1, KSIZE, KSIZE), dtype=jnp.float32) * 0.3
    conv_b = jax.random.normal(kb, (1,), dtype=jnp.float32) * 0.1
    gamma = jnp.asarray(1.2, jnp.float32)
    beta = jnp.asarray(0.1, jnp.float32)
    run_mean = jnp.asarray(0.05, jnp.float32)
    run_var = jnp.asarray(0.8, jnp.float32)

    for STRIDE in (2, 1):
        out = conv_dw_forward(x, w, conv_b[0], gamma, beta, run_mean, run_var,
                              stride=STRIDE)
        out = jax.block_until_ready(out)
        ref = _reference(x, w, conv_b[0], gamma, beta, run_mean, run_var,
                         stride=STRIDE)
        h_exp = (H - KSIZE) // STRIDE + 1
        w_exp = (W - KSIZE) // STRIDE + 1
        assert out.shape == (N, C, h_exp, w_exp), out.shape
        assert jnp.allclose(out, ref, atol=1e-4, rtol=1e-4), (
            STRIDE, float(jnp.max(jnp.abs(out - ref))))

    print("KERNEL_OK")
</pallas_src>

<mosaic_0001>
module attributes {stable_mosaic.version = 11 : i64} {
  func.func @kernel(%arg0: i32, %arg1: memref<16x16x8xf32, #tpu.memory_space<vmem>>, %arg2: memref<3x3xf32, #tpu.memory_space<smem>>, %arg3: memref<1xf32, #tpu.memory_space<smem>>, %arg4: memref<7x7x8xf32, #tpu.memory_space<vmem>>) attributes {dimension_semantics = [#tpu.dimension_semantics<parallel>], iteration_bounds = array<i64: 1>, scalar_prefetch = 0 : i64, scratch_operands = 0 : i64, tpu.core_type = #tpu.core_type<tc>, window_params = [{transform_indices = @transform_0, window_bounds = array<i64: 16, 16, 8>}, {transform_indices = @transform_1, window_bounds = array<i64: 3, 3>}, {transform_indices = @transform_2, window_bounds = array<i64: 1>}, {transform_indices = @transform_3, window_bounds = array<i64: 7, 7, 8>}]} {
    %c0 = arith.constant 0 : index
    %c0_0 = arith.constant 0 : index
    %0 = memref.load %arg2[%c0, %c0_0] : memref<3x3xf32, #tpu.memory_space<smem>>
    %c0_1 = arith.constant 0 : index
    %c1 = arith.constant 1 : index
    %1 = memref.load %arg2[%c0_1, %c1] : memref<3x3xf32, #tpu.memory_space<smem>>
    %c0_2 = arith.constant 0 : index
    %c2 = arith.constant 2 : index
    %2 = memref.load %arg2[%c0_2, %c2] : memref<3x3xf32, #tpu.memory_space<smem>>
    %c1_3 = arith.constant 1 : index
    %c0_4 = arith.constant 0 : index
    %3 = memref.load %arg2[%c1_3, %c0_4] : memref<3x3xf32, #tpu.memory_space<smem>>
    %c1_5 = arith.constant 1 : index
    %c1_6 = arith.constant 1 : index
    %4 = memref.load %arg2[%c1_5, %c1_6] : memref<3x3xf32, #tpu.memory_space<smem>>
    %c1_7 = arith.constant 1 : index
    %c2_8 = arith.constant 2 : index
    %5 = memref.load %arg2[%c1_7, %c2_8] : memref<3x3xf32, #tpu.memory_space<smem>>
    %c2_9 = arith.constant 2 : index
    %c0_10 = arith.constant 0 : index
    %6 = memref.load %arg2[%c2_9, %c0_10] : memref<3x3xf32, #tpu.memory_space<smem>>
    %c2_11 = arith.constant 2 : index
    %c1_12 = arith.constant 1 : index
    %7 = memref.load %arg2[%c2_11, %c1_12] : memref<3x3xf32, #tpu.memory_space<smem>>
    %c2_13 = arith.constant 2 : index
    %c2_14 = arith.constant 2 : index
    %8 = memref.load %arg2[%c2_13, %c2_14] : memref<3x3xf32, #tpu.memory_space<smem>>
    %c0_15 = arith.constant 0 : index
    %9 = memref.load %arg3[%c0_15] : memref<1xf32, #tpu.memory_space<smem>>
    %cst = arith.constant 0.000000e+00 : f32
    %10 = vector.broadcast %cst : f32 to vector<7x7x8xf32>
    %c0_16 = arith.constant 0 : index
    %c0_17 = arith.constant 0 : index
    %c0_18 = arith.constant 0 : index
    %11 = tpu.strided_load %arg1[%c0_16, %c0_17, %c0_18] {strides = array<i32: 2, 2, 1>} : memref<16x16x8xf32, #tpu.memory_space<vmem>>, vector<7x7x8xf32>
    %12 = vector.broadcast %0 : f32 to vector<7x7x8xf32>
    %13 = arith.mulf %12, %11 : vector<7x7x8xf32>
    %14 = arith.addf %10, %13 : vector<7x7x8xf32>
    %c0_19 = arith.constant 0 : index
    %c1_20 = arith.constant 1 : index
    %c0_21 = arith.constant 0 : index
    %15 = tpu.strided_load %arg1[%c0_19, %c1_20, %c0_21] {strides = array<i32: 2, 2, 1>} : memref<16x16x8xf32, #tpu.memory_space<vmem>>, vector<7x7x8xf32>
    %16 = vector.broadcast %1 : f32 to vector<7x7x8xf32>
    %17 = arith.mulf %16, %15 : vector<7x7x8xf32>
    %18 = arith.addf %14, %17 : vector<7x7x8xf32>
    %c0_22 = arith.constant 0 : index
    %c2_23 = arith.constant 2 : index
    %c0_24 = arith.constant 0 : index
    %19 = tpu.strided_load %arg1[%c0_22, %c2_23, %c0_24] {strides = array<i32: 2, 2, 1>} : memref<16x16x8xf32, #tpu.memory_space<vmem>>, vector<7x7x8xf32>
    %20 = vector.broadcast %2 : f32 to vector<7x7x8xf32>
    %21 = arith.mulf %20, %19 : vector<7x7x8xf32>
    %22 = arith.addf %18, %21 : vector<7x7x8xf32>
    %c1_25 = arith.constant 1 : index
    %c0_26 = arith.constant 0 : index
    %c0_27 = arith.constant 0 : index
    %23 = tpu.strided_load %arg1[%c1_25, %c0_26, %c0_27] {strides = array<i32: 2, 2, 1>} : memref<16x16x8xf32, #tpu.memory_space<vmem>>, vector<7x7x8xf32>
    %24 = vector.broadcast %3 : f32 to vector<7x7x8xf32>
    %25 = arith.mulf %24, %23 : vector<7x7x8xf32>
    %26 = arith.addf %22, %25 : vector<7x7x8xf32>
    %c1_28 = arith.constant 1 : index
    %c1_29 = arith.constant 1 : index
    %c0_30 = arith.constant 0 : index
    %27 = tpu.strided_load %arg1[%c1_28, %c1_29, %c0_30] {strides = array<i32: 2, 2, 1>} : memref<16x16x8xf32, #tpu.memory_space<vmem>>, vector<7x7x8xf32>
    %28 = vector.broadcast %4 : f32 to vector<7x7x8xf32>
    %29 = arith.mulf %28, %27 : vector<7x7x8xf32>
    %30 = arith.addf %26, %29 : vector<7x7x8xf32>
    %c1_31 = arith.constant 1 : index
    %c2_32 = arith.constant 2 : index
    %c0_33 = arith.constant 0 : index
    %31 = tpu.strided_load %arg1[%c1_31, %c2_32, %c0_33] {strides = array<i32: 2, 2, 1>} : memref<16x16x8xf32, #tpu.memory_space<vmem>>, vector<7x7x8xf32>
    %32 = vector.broadcast %5 : f32 to vector<7x7x8xf32>
    %33 = arith.mulf %32, %31 : vector<7x7x8xf32>
    %34 = arith.addf %30, %33 : vector<7x7x8xf32>
    %c2_34 = arith.constant 2 : index
    %c0_35 = arith.constant 0 : index
    %c0_36 = arith.constant 0 : index
    %35 = tpu.strided_load %arg1[%c2_34, %c0_35, %c0_36] {strides = array<i32: 2, 2, 1>} : memref<16x16x8xf32, #tpu.memory_space<vmem>>, vector<7x7x8xf32>
    %36 = vector.broadcast %6 : f32 to vector<7x7x8xf32>
    %37 = arith.mulf %36, %35 : vector<7x7x8xf32>
    %38 = arith.addf %34, %37 : vector<7x7x8xf32>
    %c2_37 = arith.constant 2 : index
    %c1_38 = arith.constant 1 : index
    %c0_39 = arith.constant 0 : index
    %39 = tpu.strided_load %arg1[%c2_37, %c1_38, %c0_39] {strides = array<i32: 2, 2, 1>} : memref<16x16x8xf32, #tpu.memory_space<vmem>>, vector<7x7x8xf32>
    %40 = vector.broadcast %7 : f32 to vector<7x7x8xf32>
    %41 = arith.mulf %40, %39 : vector<7x7x8xf32>
    %42 = arith.addf %38, %41 : vector<7x7x8xf32>
    %c2_40 = arith.constant 2 : index
    %c2_41 = arith.constant 2 : index
    %c0_42 = arith.constant 0 : index
    %43 = tpu.strided_load %arg1[%c2_40, %c2_41, %c0_42] {strides = array<i32: 2, 2, 1>} : memref<16x16x8xf32, #tpu.memory_space<vmem>>, vector<7x7x8xf32>
    %44 = vector.broadcast %8 : f32 to vector<7x7x8xf32>
    %45 = arith.mulf %44, %43 : vector<7x7x8xf32>
    %46 = arith.addf %42, %45 : vector<7x7x8xf32>
    %47 = vector.broadcast %9 : f32 to vector<7x7x8xf32>
    %48 = arith.addf %46, %47 : vector<7x7x8xf32>
    %cst_43 = arith.constant 0.000000e+00 : f32
    %49 = vector.broadcast %cst_43 : f32 to vector<7x7x8xf32>
    %50 = arith.maximumf %48, %49 : vector<7x7x8xf32>
    %c0_44 = arith.constant 0 : index
    %c0_45 = arith.constant 0 : index
    %c0_46 = arith.constant 0 : index
    %51 = vector.load %arg4[%c0_44, %c0_45, %c0_46] : memref<7x7x8xf32, #tpu.memory_space<vmem>>, vector<7x7x8xf32>
    tpu.vector_store %arg4[%c0_44, %c0_45, %c0_46], %50 {strides = array<i32>} : memref<7x7x8xf32, #tpu.memory_space<vmem>>, vector<7x7x8xf32>,
    return
  }
  func.func @transform_0(%arg0: i32) -> (i32, i32, i32) {
    %c0_i32 = arith.constant 0 : i32
    %c0_i32_0 = arith.constant 0 : i32
    %c0_i32_1 = arith.constant 0 : i32
    return %c0_i32, %c0_i32_0, %arg0 : i32, i32, i32
  }
  func.func @transform_1(%arg0: i32) -> (i32, i32) {
    %c0_i32 = arith.constant 0 : i32
    %c0_i32_0 = arith.constant 0 : i32
    %c0_i32_1 = arith.constant 0 : i32
    return %c0_i32, %c0_i32_0 : i32, i32
  }
  func.func @transform_2(%arg0: i32) -> i32 {
    %c0_i32 = arith.constant 0 : i32
    %c0_i32_0 = arith.constant 0 : i32
    return %c0_i32 : i32
  }
  func.func @transform_3(%arg0: i32) -> (i32, i32, i32) {
    %c0_i32 = arith.constant 0 : i32
    %c0_i32_0 = arith.constant 0 : i32
    %c0_i32_1 = arith.constant 0 : i32
    return %c0_i32, %c0_i32_0, %arg0 : i32, i32, i32
  }
}

</mosaic_0001>

<llo_original>
// kernel: tpu_custom_call.1
$region0: #{tpu_custom_call.1}
  #allocation0 [shape = 'u32[]', space=smem, size = 0x4, offset = 0x4, fixed_abs, tag = 'smem constant byte address 0x4 - core index']
  #allocation1 [shape = 'u32[72,128]{1,0:T(1,128)}', space=vmem, size = 0x9000, scoped, tag = 'internal scratch']
  #allocation2 [shape = 'f32[1]{0:T(128)S(6)}', space=smem, size = 0x200, scoped, tag = 'scoped memory for tpu_custom_call.1']
  %s0 = inlined_call_operand.vmem [shape: f32[16,16,8], index: 0, kind: input, shape index: {}]
  %s1 = inlined_call_operand.vmem [shape: f32[3,3], index: 1, kind: input, shape index: {}]
  %s2 = inlined_call_operand.<no memory space> [shape: f32[1], index: 2, kind: input, shape index: {}]
  %s3 = inlined_call_operand.hbm [shape: f32[7,7,8], index: 3, kind: output, shape index: {}]
  %s4 = sld [smem:[#allocation0]]
  $region26: #{tpu_custom_call.1} parent=0
    _
  %s6 = ssub.s32 1, %s4
  %s7 = scalar_select 0, %s6, %s4
  %8 = sst [smem:[#allocation2]] %s2
  $region1: #{tpu_custom_call.1} parent=0
    #allocation3 [shape = 'u8[2048]{0}', space=smem, size = 0x800, scoped, tag = 'input window, operand 1, single buffered']
    #allocation4 [shape = 's32[1]{0}', space=sflag, size = 0x4, scoped, tag = 'scoped memory for tpu_custom_call.1']
    #allocation5 [shape = 's32[1]{0}', space=sflag, size = 0x4, scoped, tag = 'scoped memory for tpu_custom_call.1']
    #allocation6 [shape = 'u8[28672]{0}', space=vmem, size = 0x7000, scoped, tag = 'output window, operand 0, single buffered']
    %9 = vsyncpa [#allocation5], 0
    %10 = vsyncpa [#allocation4], 0
    // Predicated region
    $region2: #{tpu_custom_call.1} parent=1 // pred_check
      _
    $region3: #{tpu_custom_call.1} parent=1 // pred_check_branch
      %12 = sbr.rel (0) target = $region5
    $region4: #{tpu_custom_call.1} parent=1 // pred_region
      _
    $region5: #{tpu_custom_call.1} parent=1 // pred_fallthru
      _
    // Predicated region
    $region6: #{tpu_custom_call.1} parent=1 // pred_check
      _
    $region7: #{tpu_custom_call.1} parent=1 // pred_check_branch
      %14 = sbr.rel (0) target = $region9
    $region8: #{tpu_custom_call.1} parent=1 // pred_region
      %16 = vsyncadd [#allocation5], 0
      %s18 = sshll.u32 %s1, 4
      %s19 = int_to_ptr.vmem [resolvable:$true] %s18
      %21 = dma.vmem_to_smem %s19, 64, [#allocation3], [#allocation5]
    $region9: #{tpu_custom_call.1} parent=1 // pred_fallthru
      _
    // Predicated region
    $region10: #{tpu_custom_call.1} parent=1 // pred_check
      _
    $region11: #{tpu_custom_call.1} parent=1 // pred_check_branch
      %23 = sbr.rel (0) target = $region13
    $region12: #{tpu_custom_call.1} parent=1 // pred_region
      _
    $region13: #{tpu_custom_call.1} parent=1 // pred_fallthru
      _
    // Predicated region
    $region14: #{tpu_custom_call.1} parent=1 // pred_check
      _
    $region15: #{tpu_custom_call.1} parent=1 // pred_check_branch
      %25 = sbr.rel (0) target = $region17
    $region16: #{tpu_custom_call.1} parent=1 // pred_region
      %27 = dma.done [#allocation5], 64
    $region17: #{tpu_custom_call.1} parent=1 // pred_fallthru
      _
    %28 = sfence
    %s29 = sld [smem:[#allocation3]]
    %s30 = sld [smem:[#allocation3 + $0x1]]
    %s31 = sld [smem:[#allocation3 + $0x2]]
    %s32 = sld [smem:[#allocation3 + $0x80]]
    %s33 = sld [smem:[#allocation3 + $0x81]]
    %s34 = sld [smem:[#allocation3 + $0x82]]
    %s35 = sld [smem:[#allocation3 + $0x100]]
    %s36 = sld [smem:[#allocation3 + $0x101]]
    %s37 = sld [smem:[#allocation3 + $0x102]]
    %s38 = sld [smem:[#allocation2]]
    %v39 = vld [vmem:[%s0] ss:$2 sm:$0x7f]
    %s40 = scalar_lea.vmem %s0, 32
    %v41 = vld [vmem:[%s40] ss:$2 sm:$0x7f]
    %s42 = scalar_lea.vmem %s0, 64
    %v43 = vld [vmem:[%s42] ss:$2 sm:$0x7f]
    %s44 = scalar_lea.vmem %s0, 96
    %v45 = vld [vmem:[%s44] ss:$2 sm:$0x7f]
    %s46 = scalar_lea.vmem %s0, 128
    %v47 = vld [vmem:[%s46] ss:$2 sm:$0x7f]
    %s48 = scalar_lea.vmem %s0, 160
    %v49 = vld [vmem:[%s48] ss:$2 sm:$0x7f]
    %s50 = scalar_lea.vmem %s0, 192
    %v51 = vld [vmem:[%s50] ss:$2 sm:$0x7f]
    %v52 = vstv %s29
    %v53 = vmul.f32 %v52, %v39
    %v54 = vmul.f32 %v52, %v41
    %v55 = vmul.f32 %v52, %v43
    %v56 = vmul.f32 %v52, %v45
    %v57 = vmul.f32 %v52, %v47
    %v58 = vmul.f32 %v52, %v49
    %v59 = vmul.f32 %v52, %v51
    %v60 = vadd.f32 %v53, 0.0
    %v61 = vadd.f32 %v54, 0.0
    %v62 = vadd.f32 %v55, 0.0
    %v63 = vadd.f32 %v56, 0.0
    %v64 = vadd.f32 %v57, 0.0
    %v65 = vadd.f32 %v58, 0.0
    %v66 = vadd.f32 %v59, 0.0
    %s67 = scalar_lea.vmem %s0, 1
    %v68 = vld [vmem:[%s67] ss:$2 sm:$0x7f]
    %s69 = scalar_lea.vmem %s0, 33
    %v70 = vld [vmem:[%s69] ss:$2 sm:$0x7f]
    %s71 = scalar_lea.vmem %s0, 65
    %v72 = vld [vmem:[%s71] ss:$2 sm:$0x7f]
    %s73 = scalar_lea.vmem %s0, 97
    %v74 = vld [vmem:[%s73] ss:$2 sm:$0x7f]
    %s75 = scalar_lea.vmem %s0, 129
    %v76 = vld [vmem:[%s75] ss:$2 sm:$0x7f]
    %s77 = scalar_lea.vmem %s0, 161
    %v78 = vld [vmem:[%s77] ss:$2 sm:$0x7f]
    %s79 = scalar_lea.vmem %s0, 193
    %v80 = vld [vmem:[%s79] ss:$2 sm:$0x7f]
    %v81 = vstv %s30
    %v82 = vmul.f32 %v81, %v68
    %v83 = vmul.f32 %v81, %v70
    %v84 = vmul.f32 %v81, %v72
    %v85 = vmul.f32 %v81, %v74
    %v86 = vmul.f32 %v81, %v76
    %v87 = vmul.f32 %v81, %v78
    %v88 = vmul.f32 %v81, %v80
    %v89 = vadd.f32 %v60, %v82
    %v90 = vadd.f32 %v61, %v83
    %v91 = vadd.f32 %v62, %v84
    %v92 = vadd.f32 %v63, %v85
    %v93 = vadd.f32 %v64, %v86
    %v94 = vadd.f32 %v65, %v87
    %v95 = vadd.f32 %v66, %v88
    %s96 = scalar_lea.vmem %s0, 2
    %v97 = vld [vmem:[%s96] ss:$2 sm:$0x7f]
    %s98 = scalar_lea.vmem %s0, 34
    %v99 = vld [vmem:[%s98] ss:$2 sm:$0x7f]
    %s100 = scalar_lea.vmem %s0, 66
    %v101 = vld [vmem:[%s100] ss:$2 sm:$0x7f]
    %s102 = scalar_lea.vmem %s0, 98
    %v103 = vld [vmem:[%s102] ss:$2 sm:$0x7f]
    %s104 = scalar_lea.vmem %s0, 130
    %v105 = vld [vmem:[%s104] ss:$2 sm:$0x7f]
    %s106 = scalar_lea.vmem %s0, 162
    %v107 = vld [vmem:[%s106] ss:$2 sm:$0x7f]
    %s108 = scalar_lea.vmem %s0, 194
    %v109 = vld [vmem:[%s108] ss:$2 sm:$0x7f]
    %v110 = vstv %s31
    %v111 = vmul.f32 %v110, %v97
    %v112 = vmul.f32 %v110, %v99
    %v113 = vmul.f32 %v110, %v101
    %v114 = vmul.f32 %v110, %v103
    %v115 = vmul.f32 %v110, %v105
    %v116 = vmul.f32 %v110, %v107
    %v117 = vmul.f32 %v110, %v109
    %v118 = vadd.f32 %v89, %v111
    %v119 = vadd.f32 %v90, %v112
    %v120 = vadd.f32 %v91, %v113
    %v121 = vadd.f32 %v92, %v114
    %v122 = vadd.f32 %v93, %v115
    %v123 = vadd.f32 %v94, %v116
    %v124 = vadd.f32 %v95, %v117
    %s125 = scalar_lea.vmem %s0, 16
    %v126 = vld [vmem:[%s125] ss:$2 sm:$0x7f]
    %s127 = scalar_lea.vmem %s125, 32
    %v128 = vld [vmem:[%s127] ss:$2 sm:$0x7f]
    %s129 = scalar_lea.vmem %s125, 64
    %v130 = vld [vmem:[%s129] ss:$2 sm:$0x7f]
    %s131 = scalar_lea.vmem %s125, 96
    %v132 = vld [vmem:[%s131] ss:$2 sm:$0x7f]
    %s133 = scalar_lea.vmem %s125, 128
    %v134 = vld [vmem:[%s133] ss:$2 sm:$0x7f]
    %s135 = scalar_lea.vmem %s125, 160
    %v136 = vld [vmem:[%s135] ss:$2 sm:$0x7f]
    %s137 = scalar_lea.vmem %s125, 192
    %v138 = vld [vmem:[%s137] ss:$2 sm:$0x7f]
    %v139 = vstv %s32
    %v140 = vmul.f32 %v139, %v126
    %v141 = vmul.f32 %v139, %v128
    %v142 = vmul.f32 %v139, %v130
    %v143 = vmul.f32 %v139, %v132
    %v144 = vmul.f32 %v139, %v134
    %v145 = vmul.f32 %v139, %v136
    %v146 = vmul.f32 %v139, %v138
    %v147 = vadd.f32 %v118, %v140
    %v148 = vadd.f32 %v119, %v141
    %v149 = vadd.f32 %v120, %v142
    %v150 = vadd.f32 %v121, %v143
    %v151 = vadd.f32 %v122, %v144
    %v152 = vadd.f32 %v123, %v145
    %v153 = vadd.f32 %v124, %v146
    %s154 = scalar_lea.vmem %s125, 1
    %v155 = vld [vmem:[%s154] ss:$2 sm:$0x7f]
    %s156 = scalar_lea.vmem %s125, 33
    %v157 = vld [vmem:[%s156] ss:$2 sm:$0x7f]
    %s158 = scalar_lea.vmem %s125, 65
    %v159 = vld [vmem:[%s158] ss:$2 sm:$0x7f]
    %s160 = scalar_lea.vmem %s125, 97
    %v161 = vld [vmem:[%s160] ss:$2 sm:$0x7f]
    %s162 = scalar_lea.vmem %s125, 129
    %v163 = vld [vmem:[%s162] ss:$2 sm:$0x7f]
    %s164 = scalar_lea.vmem %s125, 161
    %v165 = vld [vmem:[%s164] ss:$2 sm:$0x7f]
    %s166 = scalar_lea.vmem %s125, 193
    %v167 = vld [vmem:[%s166] ss:$2 sm:$0x7f]
    %v168 = vstv %s33
    %v169 = vmul.f32 %v168, %v155
    %v170 = vmul.f32 %v168, %v157
    %v171 = vmul.f32 %v168, %v159
    %v172 = vmul.f32 %v168, %v161
    %v173 = vmul.f32 %v168, %v163
    %v174 = vmul.f32 %v168, %v165
    %v175 = vmul.f32 %v168, %v167
    %v176 = vadd.f32 %v147, %v169
    %v177 = vadd.f32 %v148, %v170
    %v178 = vadd.f32 %v149, %v171
    %v179 = vadd.f32 %v150, %v172
    %v180 = vadd.f32 %v151, %v173
    %v181 = vadd.f32 %v152, %v174
    %v182 = vadd.f32 %v153, %v175
    %s183 = scalar_lea.vmem %s125, 2
    %v184 = vld [vmem:[%s183] ss:$2 sm:$0x7f]
    %s185 = scalar_lea.vmem %s125, 34
    %v186 = vld [vmem:[%s185] ss:$2 sm:$0x7f]
    %s187 = scalar_lea.vmem %s125, 66
    %v188 = vld [vmem:[%s187] ss:$2 sm:$0x7f]
    %s189 = scalar_lea.vmem %s125, 98
    %v190 = vld [vmem:[%s189] ss:$2 sm:$0x7f]
    %s191 = scalar_lea.vmem %s125, 130
    %v192 = vld [vmem:[%s191] ss:$2 sm:$0x7f]
    %s193 = scalar_lea.vmem %s125, 162
    %v194 = vld [vmem:[%s193] ss:$2 sm:$0x7f]
    %s195 = scalar_lea.vmem %s125, 194
    %v196 = vld [vmem:[%s195] ss:$2 sm:$0x7f]
    %v197 = vstv %s34
    %v198 = vmul.f32 %v197, %v184
    %v199 = vmul.f32 %v197, %v186
    %v200 = vmul.f32 %v197, %v188
    %v201 = vmul.f32 %v197, %v190
    %v202 = vmul.f32 %v197, %v192
    %v203 = vmul.f32 %v197, %v194
    %v204 = vmul.f32 %v197, %v196
    %v205 = vadd.f32 %v176, %v198
    %v206 = vadd.f32 %v177, %v199
    %v207 = vadd.f32 %v178, %v200
    %v208 = vadd.f32 %v179, %v201
    %v209 = vadd.f32 %v180, %v202
    %v210 = vadd.f32 %v181, %v203
    %v211 = vadd.f32 %v182, %v204
    %s212 = scalar_lea.vmem %s0, 32
    %v213 = vld [vmem:[%s212] ss:$2 sm:$0x7f]
    %s214 = scalar_lea.vmem %s212, 32
    %v215 = vld [vmem:[%s214] ss:$2 sm:$0x7f]
    %s216 = scalar_lea.vmem %s212, 64
    %v217 = vld [vmem:[%s216] ss:$2 sm:$0x7f]
    %s218 = scalar_lea.vmem %s212, 96
    %v219 = vld [vmem:[%s218] ss:$2 sm:$0x7f]
    %s220 = scalar_lea.vmem %s212, 128
    %v221 = vld [vmem:[%s220] ss:$2 sm:$0x7f]
    %s222 = scalar_lea.vmem %s212, 160
    %v223 = vld [vmem:[%s222] ss:$2 sm:$0x7f]
    %s224 = scalar_lea.vmem %s212, 192
    %v225 = vld [vmem:[%s224] ss:$2 sm:$0x7f]
    %v226 = vstv %s35
    %v227 = vmul.f32 %v226, %v213
    %v228 = vmul.f32 %v226, %v215
    %v229 = vmul.f32 %v226, %v217
    %v230 = vmul.f32 %v226, %v219
    %v231 = vmul.f32 %v226, %v221
    %v232 = vmul.f32 %v226, %v223
    %v233 = vmul.f32 %v226, %v225
    %v234 = vadd.f32 %v205, %v227
    %v235 = vadd.f32 %v206, %v228
    %v236 = vadd.f32 %v207, %v229
    %v237 = vadd.f32 %v208, %v230
    %v238 = vadd.f32 %v209, %v231
    %v239 = vadd.f32 %v210, %v232
    %v240 = vadd.f32 %v211, %v233
    %s241 = scalar_lea.vmem %s212, 1
    %v242 = vld [vmem:[%s241] ss:$2 sm:$0x7f]
    %s243 = scalar_lea.vmem %s212, 33
    %v244 = vld [vmem:[%s243] ss:$2 sm:$0x7f]
    %s245 = scalar_lea.vmem %s212, 65
    %v246 = vld [vmem:[%s245] ss:$2 sm:$0x7f]
    %s247 = scalar_lea.vmem %s212, 97
    %v248 = vld [vmem:[%s247] ss:$2 sm:$0x7f]
    %s249 = scalar_lea.vmem %s212, 129
    %v250 = vld [vmem:[%s249] ss:$2 sm:$0x7f]
    %s251 = scalar_lea.vmem %s212, 161
    %v252 = vld [vmem:[%s251] ss:$2 sm:$0x7f]
    %s253 = scalar_lea.vmem %s212, 193
    %v254 = vld [vmem:[%s253] ss:$2 sm:$0x7f]
    %v255 = vstv %s36
    %v256 = vmul.f32 %v255, %v242
    %v257 = vmul.f32 %v255, %v244
    %v258 = vmul.f32 %v255, %v246
    %v259 = vmul.f32 %v255, %v248
    %v260 = vmul.f32 %v255, %v250
    %v261 = vmul.f32 %v255, %v252
    %v262 = vmul.f32 %v255, %v254
    %v263 = vadd.f32 %v234, %v256
    %v264 = vadd.f32 %v235, %v257
    %v265 = vadd.f32 %v236, %v258
    %v266 = vadd.f32 %v237, %v259
    %v267 = vadd.f32 %v238, %v260
    %v268 = vadd.f32 %v239, %v261
    %v269 = vadd.f32 %v240, %v262
    %s270 = scalar_lea.vmem %s212, 2
    %v271 = vld [vmem:[%s270] ss:$2 sm:$0x7f]
    %s272 = scalar_lea.vmem %s212, 34
    %v273 = vld [vmem:[%s272] ss:$2 sm:$0x7f]
    %s274 = scalar_lea.vmem %s212, 66
    %v275 = vld [vmem:[%s274] ss:$2 sm:$0x7f]
    %s276 = scalar_lea.vmem %s212, 98
    %v277 = vld [vmem:[%s276] ss:$2 sm:$0x7f]
    %s278 = scalar_lea.vmem %s212, 130
    %v279 = vld [vmem:[%s278] ss:$2 sm:$0x7f]
    %s280 = scalar_lea.vmem %s212, 162
    %v281 = vld [vmem:[%s280] ss:$2 sm:$0x7f]
    %s282 = scalar_lea.vmem %s212, 194
    %v283 = vld [vmem:[%s282] ss:$2 sm:$0x7f]
    %v284 = vstv %s37
    %v285 = vmul.f32 %v284, %v271
    %v286 = vmul.f32 %v284, %v273
    %v287 = vmul.f32 %v284, %v275
    %v288 = vmul.f32 %v284, %v277
    %v289 = vmul.f32 %v284, %v279
    %v290 = vmul.f32 %v284, %v281
    %v291 = vmul.f32 %v284, %v283
    %v292 = vadd.f32 %v263, %v285
    %v293 = vadd.f32 %v264, %v286
    %v294 = vadd.f32 %v265, %v287
    %v295 = vadd.f32 %v266, %v288
    %v296 = vadd.f32 %v267, %v289
    %v297 = vadd.f32 %v268, %v290
    %v298 = vadd.f32 %v269, %v291
    %v299 = vstv %s38
    %v300 = vadd.f32 %v292, %v299
    %v301 = vadd.f32 %v293, %v299
    %v302 = vadd.f32 %v294, %v299
    %v303 = vadd.f32 %v295, %v299
    %v304 = vadd.f32 %v296, %v299
    %v305 = vadd.f32 %v297, %v299
    %v306 = vadd.f32 %v298, %v299
    %v307 = vmax.f32 %v300, 0.0
    %v308 = vmax.f32 %v301, 0.0
    %v309 = vmax.f32 %v302, 0.0
    %v310 = vmax.f32 %v303, 0.0
    %v311 = vmax.f32 %v304, 0.0
    %v312 = vmax.f32 %v305, 0.0
    %v313 = vmax.f32 %v306, 0.0
    %vm314 = vcmask 63488
    %315 = vst.msk [vmem:[#allocation6] sm:$0x7f] %vm314, %v307
    %316 = vst.msk [vmem:[#allocation6 + $0x8] sm:$0x7f] %vm314, %v308
    %317 = vst.msk [vmem:[#allocation6 + $0x10] sm:$0x7f] %vm314, %v309
    %318 = vst.msk [vmem:[#allocation6 + $0x18] sm:$0x7f] %vm314, %v310
    %319 = vst.msk [vmem:[#allocation6 + $0x20] sm:$0x7f] %vm314, %v311
    %320 = vst.msk [vmem:[#allocation6 + $0x28] sm:$0x7f] %vm314, %v312
    %321 = vst.msk [vmem:[#allocation6 + $0x30] sm:$0x7f] %vm314, %v313
    // Predicated region
    $region18: #{tpu_custom_call.1} parent=1 // pred_check
      _
    $region19: #{tpu_custom_call.1} parent=1 // pred_check_branch
      %323 = sbr.rel (0) target = $region21
    $region20: #{tpu_custom_call.1} parent=1 // pred_region
      %325 = vsyncadd [#allocation4], 0
      %s326 = sshll.u32 [#allocation6], 4
      %s327 = int_to_ptr.vmem [resolvable:$true] %s326
      %s328 = sshll.u32 %s3, 4
      %s329 = int_to_ptr.hbm [resolvable:$true] %s328
      %334 = dma.vmem_to_hbm [thread:$0]  %s327, 896, %s329, [#allocation4], 128, 128, 8
    $region21: #{tpu_custom_call.1} parent=1 // pred_fallthru
      _
    // Predicated region
    $region22: #{tpu_custom_call.1} parent=1 // pred_check
      _
    $region23: #{tpu_custom_call.1} parent=1 // pred_check_branch
      %336 = sbr.rel (0) target = $region25
    $region24: #{tpu_custom_call.1} parent=1 // pred_region
      %338 = dma.done [#allocation4], 896
    $region25: #{tpu_custom_call.1} parent=1 // pred_fallthru
      _
    %339 = vsyncpa [#allocation4], 1
    %340 = vsyncpa [#allocation5], 1

</llo_original>
